<compile_context>
chip_gen: v6e
topology: v6e:2x2x1
jax: 0.10.0
libtpu: 0.0.40
codegen_flags: <defaults>
</compile_context>

<pallas_src>
import jax
import jax.numpy as jnp
from jax.experimental import pallas as pl
from jax.experimental.pallas import tpu as pltpu

EPS = 1e-5                             # PyTorch BatchNorm1d default eps
WEIGHT_DTYPE = jnp.bfloat16            # weights streamed from HBM in bf16
VMEM_LIMIT_BYTES = 48 * 1024 * 1024    # < 64 MiB physical VMEM of v7x


# ---------------------------------------------------------------------------
# Parameter prep: fold eval-mode BatchNorm into the preceding Linear.
#   y = gamma*(x@w + b - mean)*rsqrt(var+eps) + beta
#     = x @ (w*scale) + ((b-mean)*scale + beta),   scale = gamma*rsqrt(var+eps)
# ---------------------------------------------------------------------------
def fold_bn_into_linear(w, b, gamma, beta, mean, var, weight_dtype=WEIGHT_DTYPE):
    scale = gamma * jax.lax.rsqrt(var + EPS)                    # (Dout,)
    w_f = (w * scale[None, :]).astype(weight_dtype)             # (Din, Dout)
    b_f = ((b - mean) * scale + beta).astype(jnp.float32)       # (Dout,)
    return w_f, b_f


def fold_bn_into_linear_stacked(W, b, gamma, beta, mean, var,
                                weight_dtype=WEIGHT_DTYPE):
    scale = gamma * jax.lax.rsqrt(var + EPS)                    # (T, H)
    W_f = (W * scale[:, None, :]).astype(weight_dtype)          # (T, H, H)
    b_f = ((b - mean) * scale + beta).astype(jnp.float32)       # (T, H)
    return W_f, b_f


def pack_params(mlp_raw, head_raw):
    """Fold BN + cast weights for the Pallas kernels."""
    mlp_layers = [fold_bn_into_linear(*layer) for layer in mlp_raw]
    W1, b1, gamma, beta, mean, var, w2, b2 = head_raw
    W1f, b1f = fold_bn_into_linear_stacked(W1, b1, gamma, beta, mean, var)
    head = (W1f, b1f, w2.astype(WEIGHT_DTYPE), b2.astype(jnp.float32))
    return mlp_layers, head


# ---------------------------------------------------------------------------
# Kernel 1: fused MLP stack.  Single pallas_call, no grid -- all (folded,
# bf16) weights, the input and the output live in VMEM simultaneously
# (~5 MB bf16 for the real [1000,1000,500] layout), so layer-to-layer
# activations never touch HBM.
# ---------------------------------------------------------------------------
def _make_fused_mlp_kernel(n_layers):
    def kernel(*refs):
        x_ref, o_ref = refs[0], refs[-1]
        h = x_ref[...]                                            # (B, Din) f32
        for i in range(n_layers):                                 # static unroll
            w = refs[1 + 2 * i][...].astype(jnp.float32)          # (Din, Dout)
            b = refs[2 + 2 * i][...]                              # (1, Dout)
            h = jnp.maximum(
                jnp.dot(h, w, preferred_element_type=jnp.float32) + b, 0.0)
            # TODO(synk): nn.Dropout(0.4) is identity in eval mode.
        o_ref[...] = h
    return kernel


def fused_mlp(x, mlp_layers):
    B = x.shape[0]
    d_out = mlp_layers[-1][0].shape[1]
    args = [x]
    for w, b in mlp_layers:
        args.append(w)
        args.append(b.reshape(1, -1))
    return pl.pallas_call(
        _make_fused_mlp_kernel(len(mlp_layers)),
        out_shape=jax.ShapeDtypeStruct((B, d_out), jnp.float32),
        compiler_params=pltpu.CompilerParams(vmem_limit_bytes=VMEM_LIMIT_BYTES),
    )(*args)


# ---------------------------------------------------------------------------
# Kernel 2: task-specific heads, TB tasks per grid step (streamed weights).
#   per task: Linear(H,H)+BN folded -> ReLU -> Linear(H,1) -> Sigmoid
# Output block is lane-dense (TB, B); the parallel task axis lets v7x's two
# TensorCores split the head work.
# ---------------------------------------------------------------------------
def _make_head_kernel(tb):
    def kernel(h_ref, w1_ref, b1_ref, w2_ref, b2_ref, o_ref):
        h = h_ref[...]                                            # (B, H) f32
        zs = []
        for i in range(tb):                                       # static unroll
            w1 = w1_ref[i].astype(jnp.float32)                    # (H, H)
            z = jnp.dot(h, w1, preferred_element_type=jnp.float32)
            z = z + b1_ref[pl.ds(i, 1), :]                        # (B,H)+(1,H)
            zs.append(jnp.maximum(z, 0.0)[None])                  # (1, B, H)
        z_all = jnp.concatenate(zs, axis=0)                       # (TB, B, H)
        w2 = w2_ref[...].astype(jnp.float32)                      # (TB, H)
        logits = jnp.sum(z_all * w2[:, None, :], axis=-1)         # (TB, B)
        o_ref[...] = jax.nn.sigmoid(logits + b2_ref[...])         # (TB, B)
    return kernel


def _pick_tasks_per_block(T, max_tb=8):
    # Block shape (TB, B): TB must be a multiple of 8 or equal the full T.
    if T <= max_tb:
        return T
    for tb in range(max_tb, 1, -1):
        if T % tb == 0 and tb % 8 == 0:
            return tb
    return T  # fallback: one block covering the whole task axis


def task_heads(h, W1f, b1f, w2, b2, *, max_tasks_per_block=8):
    T, H, _ = W1f.shape
    B = h.shape[0]
    TB = _pick_tasks_per_block(T, max_tasks_per_block)
    out = pl.pallas_call(
        _make_head_kernel(TB),
        out_shape=jax.ShapeDtypeStruct((T, B), jnp.float32),
        grid=(T // TB,),
        in_specs=[
            pl.BlockSpec((B, H), lambda t: (0, 0)),          # shared hidden acts
            pl.BlockSpec((TB, H, H), lambda t: (t, 0, 0)),   # per-block W1' (bf16)
            pl.BlockSpec((TB, H), lambda t: (t, 0)),         # b1' (f32)
            pl.BlockSpec((TB, H), lambda t: (t, 0)),         # w2  (bf16)
            pl.BlockSpec((TB, 1), lambda t: (t, 0)),         # b2  (f32)
        ],
        out_specs=pl.BlockSpec((TB, B), lambda t: (t, 0)),
        compiler_params=pltpu.CompilerParams(
            dimension_semantics=("parallel",),
            vmem_limit_bytes=VMEM_LIMIT_BYTES,
        ),
    )(h, W1f, b1f, w2, b2.reshape(T, 1))
    return out.T                                              # (B, Y_dim)


# ---------------------------------------------------------------------------
# Full forward (glue in plain JAX)
# ---------------------------------------------------------------------------
def adr_forward(x, mlp_layers, head_params):
    h = fused_mlp(x, mlp_layers)
    return task_heads(h, *head_params)


# ---------------------------------------------------------------------------
# Deterministic synthetic parameter init (raw / unfolded, module-shaped)
# ---------------------------------------------------------------------------
def init_params(key, x_dim, y_dim, layout):
    dims = [x_dim] + list(layout)
    mlp = []
    for i in range(len(layout)):
        key, k1, k2, k3, k4, k5, k6 = jax.random.split(key, 7)
        din, dout = dims[i], dims[i + 1]
        w = jax.random.normal(k1, (din, dout), jnp.float32) / jnp.sqrt(din)
        b = 0.1 * jax.random.normal(k2, (dout,), jnp.float32)
        gamma = 1.0 + 0.1 * jax.random.normal(k3, (dout,), jnp.float32)
        beta = 0.1 * jax.random.normal(k4, (dout,), jnp.float32)
        mean = 0.1 * jax.random.normal(k5, (dout,), jnp.float32)
        var = 0.5 + jnp.abs(jax.random.normal(k6, (dout,), jnp.float32))
        mlp.append((w, b, gamma, beta, mean, var))

    H = layout[-1]
    key, *ks = jax.random.split(key, 9)
    W1 = jax.random.normal(ks[0], (y_dim, H, H), jnp.float32) / jnp.sqrt(H)
    b1 = 0.1 * jax.random.normal(ks[1], (y_dim, H), jnp.float32)
    gamma = 1.0 + 0.1 * jax.random.normal(ks[2], (y_dim, H), jnp.float32)
    beta = 0.1 * jax.random.normal(ks[3], (y_dim, H), jnp.float32)
    mean = 0.1 * jax.random.normal(ks[4], (y_dim, H), jnp.float32)
    var = 0.5 + jnp.abs(jax.random.normal(ks[5], (y_dim, H), jnp.float32))
    w2 = jax.random.normal(ks[6], (y_dim, H), jnp.float32) / jnp.sqrt(H)
    b2 = 0.1 * jax.random.normal(ks[7], (y_dim,), jnp.float32)
    heads = (W1, b1, gamma, beta, mean, var, w2, b2)
    return mlp, heads


# ---------------------------------------------------------------------------
# Pure-JAX references
# ---------------------------------------------------------------------------
def reference_forward_folded(x, mlp_layers, head_params):
    """Same folded/bf16 parameters as the kernels (tight comparison)."""
    h = x
    for w, b in mlp_layers:
        h = jnp.maximum(h @ w.astype(jnp.float32) + b, 0.0)
    W1f, b1f, w2, b2 = head_params
    preds = []
    for t in range(W1f.shape[0]):
        z = jnp.maximum(h @ W1f[t].astype(jnp.float32) + b1f[t], 0.0)
        logit = z @ w2[t].astype(jnp.float32) + b2[t]
        preds.append(jax.nn.sigmoid(logit)[:, None])
    return jnp.concatenate(preds, axis=1)


def reference_forward_original(x, mlp_raw, head_raw):
    """Mirrors the PyTorch forward in eval mode, raw fp32 params (sanity)."""
    h = x
    for (w, b, g, be, m, v) in mlp_raw:
        z = h @ w + b
        z = (z - m) / jnp.sqrt(v + EPS) * g + be
        h = jnp.maximum(z, 0.0)
    W1, b1, gamma, beta, mean, var, w2, b2 = head_raw
    preds = []
    for t in range(W1.shape[0]):
        z = h @ W1[t] + b1[t]
        z = (z - mean[t]) / jnp.sqrt(var[t] + EPS) * gamma[t] + beta[t]
        z = jnp.maximum(z, 0.0)
        logit = z @ w2[t] + b2[t]
        preds.append(jax.nn.sigmoid(logit)[:, None])
    return jnp.concatenate(preds, axis=1)


if __name__ == "__main__":
    B, X_DIM, Y_DIM = 8, 64, 16
    LAYOUT = [128, 128, 128]   # small analogue of the default [1000, 1000, 500]

    key = jax.random.PRNGKey(0)
    key, kx, kp = jax.random.split(key, 3)
    x = jax.random.normal(kx, (B, X_DIM), jnp.float32)
    mlp_raw, head_raw = init_params(kp, X_DIM, Y_DIM, LAYOUT)
    mlp_layers, head_params = pack_params(mlp_raw, head_raw)

    out = adr_forward(x, mlp_layers, head_params)
    out = jax.block_until_ready(out)
    assert out.shape == (B, Y_DIM), out.shape

    # Tight check vs identical (BN-folded, bf16) parameters.
    ref_f = reference_forward_folded(x, mlp_layers, head_params)
    err_f = float(jnp.max(jnp.abs(out - ref_f)))
    assert jnp.allclose(out, ref_f, atol=3e-3, rtol=3e-3), err_f

    # Sanity check vs the original (unfolded, fp32) module semantics.
    ref_o = reference_forward_original(x, mlp_raw, head_raw)
    err_o = float(jnp.max(jnp.abs(out - ref_o)))
    assert jnp.allclose(out, ref_o, atol=3e-2, rtol=3e-2), err_o

    print("KERNEL_OK")
</pallas_src>

<mosaic_0001>
module attributes {stable_mosaic.version = 11 : i64} {
  func.func @kernel(%arg0: memref<8x64xf32, #tpu.memory_space<vmem>>, %arg1: memref<64x128xbf16, #tpu.memory_space<vmem>>, %arg2: memref<1x128xf32, #tpu.memory_space<vmem>>, %arg3: memref<128x128xbf16, #tpu.memory_space<vmem>>, %arg4: memref<1x128xf32, #tpu.memory_space<vmem>>, %arg5: memref<128x128xbf16, #tpu.memory_space<vmem>>, %arg6: memref<1x128xf32, #tpu.memory_space<vmem>>, %arg7: memref<8x128xf32, #tpu.memory_space<vmem>>) attributes {dimension_semantics = [], scalar_prefetch = 0 : i64, scratch_operands = 0 : i64, tpu.core_type = #tpu.core_type<tc>} {
    %c0 = arith.constant 0 : index
    %c0_0 = arith.constant 0 : index
    %0 = vector.load %arg0[%c0, %c0_0] : memref<8x64xf32, #tpu.memory_space<vmem>>, vector<8x64xf32>
    %c0_1 = arith.constant 0 : index
    %c0_2 = arith.constant 0 : index
    %1 = vector.load %arg1[%c0_1, %c0_2] : memref<64x128xbf16, #tpu.memory_space<vmem>>, vector<64x128xbf16>
    %2 = arith.extf %1 : vector<64x128xbf16> to vector<64x128xf32>
    %c0_3 = arith.constant 0 : index
    %c0_4 = arith.constant 0 : index
    %3 = vector.load %arg2[%c0_3, %c0_4] : memref<1x128xf32, #tpu.memory_space<vmem>>, vector<1x128xf32>
    %cst = arith.constant dense<0.000000e+00> : vector<8x128xf32>
    %4 = tpu.matmul %0, %2, %cst {dimension_numbers = #tpu.dot_dimension_numbers<[1], [0], [0], [1], [0, 0, 1, 1], [], []>} : vector<8x64xf32>, vector<64x128xf32>, vector<8x128xf32> -> vector<8x128xf32>
    %5 = vector.broadcast %3 : vector<1x128xf32> to vector<8x128xf32>
    %6 = arith.addf %4, %5 : vector<8x128xf32>
    %cst_5 = arith.constant 0.000000e+00 : f32
    %7 = vector.broadcast %cst_5 : f32 to vector<8x128xf32>
    %8 = arith.maximumf %6, %7 : vector<8x128xf32>
    %c0_6 = arith.constant 0 : index
    %c0_7 = arith.constant 0 : index
    %9 = vector.load %arg3[%c0_6, %c0_7] : memref<128x128xbf16, #tpu.memory_space<vmem>>, vector<128x128xbf16>
    %10 = arith.extf %9 : vector<128x128xbf16> to vector<128x128xf32>
    %c0_8 = arith.constant 0 : index
    %c0_9 = arith.constant 0 : index
    %11 = vector.load %arg4[%c0_8, %c0_9] : memref<1x128xf32, #tpu.memory_space<vmem>>, vector<1x128xf32>
    %cst_10 = arith.constant dense<0.000000e+00> : vector<8x128xf32>
    %12 = tpu.matmul %8, %10, %cst_10 {dimension_numbers = #tpu.dot_dimension_numbers<[1], [0], [0], [1], [0, 0, 1, 1], [], []>} : vector<8x128xf32>, vector<128x128xf32>, vector<8x128xf32> -> vector<8x128xf32>
    %13 = vector.broadcast %11 : vector<1x128xf32> to vector<8x128xf32>
    %14 = arith.addf %12, %13 : vector<8x128xf32>
    %cst_11 = arith.constant 0.000000e+00 : f32
    %15 = vector.broadcast %cst_11 : f32 to vector<8x128xf32>
    %16 = arith.maximumf %14, %15 : vector<8x128xf32>
    %c0_12 = arith.constant 0 : index
    %c0_13 = arith.constant 0 : index
    %17 = vector.load %arg5[%c0_12, %c0_13] : memref<128x128xbf16, #tpu.memory_space<vmem>>, vector<128x128xbf16>
    %18 = arith.extf %17 : vector<128x128xbf16> to vector<128x128xf32>
    %c0_14 = arith.constant 0 : index
    %c0_15 = arith.constant 0 : index
    %19 = vector.load %arg6[%c0_14, %c0_15] : memref<1x128xf32, #tpu.memory_space<vmem>>, vector<1x128xf32>
    %cst_16 = arith.constant dense<0.000000e+00> : vector<8x128xf32>
    %20 = tpu.matmul %16, %18, %cst_16 {dimension_numbers = #tpu.dot_dimension_numbers<[1], [0], [0], [1], [0, 0, 1, 1], [], []>} : vector<8x128xf32>, vector<128x128xf32>, vector<8x128xf32> -> vector<8x128xf32>
    %21 = vector.broadcast %19 : vector<1x128xf32> to vector<8x128xf32>
    %22 = arith.addf %20, %21 : vector<8x128xf32>
    %cst_17 = arith.constant 0.000000e+00 : f32
    %23 = vector.broadcast %cst_17 : f32 to vector<8x128xf32>
    %24 = arith.maximumf %22, %23 : vector<8x128xf32>
    %c0_18 = arith.constant 0 : index
    %c0_19 = arith.constant 0 : index
    %25 = vector.load %arg7[%c0_18, %c0_19] : memref<8x128xf32, #tpu.memory_space<vmem>>, vector<8x128xf32>
    tpu.vector_store %arg7[%c0_18, %c0_19], %24 {strides = array<i32>} : memref<8x128xf32, #tpu.memory_space<vmem>>, vector<8x128xf32>,
    return
  }
}

</mosaic_0001>

<llo_original>
// kernel: tpu_custom_call.1
$region0: #{tpu_custom_call.1}
  #allocation0 [shape = 'u32[]', space=smem, size = 0x4, offset = 0x4, fixed_abs, tag = 'smem constant byte address 0x4 - core index']
  #allocation1 [shape = 'u32[144,128]{1,0:T(1,128)}', space=vmem, size = 0x12000, scoped, tag = 'internal scratch']
  %s0 = inlined_call_operand.hbm [shape: f32[8,64], index: 0, kind: input, shape index: {}]
  %s1 = inlined_call_operand.hbm [shape: bf16[64,128], index: 1, kind: input, shape index: {}]
  %s2 = inlined_call_operand.vmem [shape: f32[1,128], index: 2, kind: input, shape index: {}]
  %s3 = inlined_call_operand.hbm [shape: bf16[128,128], index: 3, kind: input, shape index: {}]
  %s4 = inlined_call_operand.vmem [shape: f32[1,128], index: 4, kind: input, shape index: {}]
  %s5 = inlined_call_operand.hbm [shape: bf16[128,128], index: 5, kind: input, shape index: {}]
  %s6 = inlined_call_operand.vmem [shape: f32[1,128], index: 6, kind: input, shape index: {}]
  %s7 = inlined_call_operand.hbm [shape: f32[8,128], index: 7, kind: output, shape index: {}]
  %s8 = sld [smem:[#allocation0]]
  $region54: #{tpu_custom_call.1} parent=0
    _
  %s10 = ssub.s32 1, %s8
  %s11 = scalar_select 0, %s10, %s8
  $region1: #{tpu_custom_call.1} parent=0
    #allocation2 [shape = 'u8[4096]{0}', space=vmem, size = 0x1000, scoped, tag = 'input window, operand 0, single buffered']
    #allocation3 [shape = 's32[1]{0}', space=sflag, size = 0x4, scoped, tag = 'scoped memory for tpu_custom_call.1']
    #allocation4 [shape = 's32[1]{0}', space=sflag, size = 0x4, scoped, tag = 'scoped memory for tpu_custom_call.1']
    #allocation5 [shape = 'u8[16384]{0}', space=vmem, size = 0x4000, scoped, tag = 'input window, operand 1, single buffered']
    #allocation6 [shape = 's32[1]{0}', space=sflag, size = 0x4, scoped, tag = 'scoped memory for tpu_custom_call.1']
    #allocation7 [shape = 'u8[32768]{0}', space=vmem, size = 0x8000, scoped, tag = 'input window, operand 3, single buffered']
    #allocation8 [shape = 'u8[32768]{0}', space=vmem, size = 0x8000, scoped, tag = 'input window, operand 5, single buffered']
    #allocation9 [shape = 's32[1]{0}', space=sflag, size = 0x4, scoped, tag = 'scoped memory for tpu_custom_call.1']
    #allocation10 [shape = 'u8[4096]{0}', space=vmem, size = 0x1000, scoped, tag = 'output window, operand 0, single buffered']
    %12 = vsyncpa [#allocation3], 0
    %13 = vsyncpa [#allocation6], 0
    %14 = vsyncpa [#allocation9], 0
    %15 = vsyncpa [#allocation4], 0
    // Predicated region
    $region2: #{tpu_custom_call.1} parent=1 // pred_check
      _
    $region3: #{tpu_custom_call.1} parent=1 // pred_check_branch
      %17 = sbr.rel (0) target = $region5
    $region4: #{tpu_custom_call.1} parent=1 // pred_region
      %s19 = ssub.s32 128, 128
      %20 = vsyncadd [#allocation3], %s19
      %s22 = sshll.u32 [#allocation2], 4
      %s23 = int_to_ptr.vmem [resolvable:$true] %s22
      %25 = dma.hbm_to_vmem [thread:$0]  %s0, 128, %s23, [#allocation3]
    $region5: #{tpu_custom_call.1} parent=1 // pred_fallthru
      _
    // Predicated region
    $region6: #{tpu_custom_call.1} parent=1 // pred_check
      _
    $region7: #{tpu_custom_call.1} parent=1 // pred_check_branch
      %27 = sbr.rel (0) target = $region9
    $region8: #{tpu_custom_call.1} parent=1 // pred_region
      %s29 = ssub.s32 512, 512
      %30 = vsyncadd [#allocation6], %s29
      %s31 = sshll.u32 [#allocation5], 4
      %s32 = int_to_ptr.vmem [resolvable:$true] %s31
      %37 = dma.hbm_to_vmem [thread:$0]  %s1, 512, %s32, [#allocation6], 64, 64, 4
    $region9: #{tpu_custom_call.1} parent=1 // pred_fallthru
      _
    // Predicated region
    $region10: #{tpu_custom_call.1} parent=1 // pred_check
      _
    $region11: #{tpu_custom_call.1} parent=1 // pred_check_branch
      %39 = sbr.rel (0) target = $region13
    $region12: #{tpu_custom_call.1} parent=1 // pred_region
      _
    $region13: #{tpu_custom_call.1} parent=1 // pred_fallthru
      _
    // Predicated region
    $region14: #{tpu_custom_call.1} parent=1 // pred_check
      _
    $region15: #{tpu_custom_call.1} parent=1 // pred_check_branch
      %41 = sbr.rel (0) target = $region17
    $region16: #{tpu_custom_call.1} parent=1 // pred_region
      %s43 = ssub.s32 1024, 1024
      %44 = vsyncadd [#allocation6], %s43
      %s45 = sshll.u32 [#allocation7], 4
      %s46 = int_to_ptr.vmem [resolvable:$true] %s45
      %51 = dma.hbm_to_vmem [thread:$0]  %s3, 1024, %s46, [#allocation6], 64, 64, 4
    $region17: #{tpu_custom_call.1} parent=1 // pred_fallthru
      _
    // Predicated region
    $region18: #{tpu_custom_call.1} parent=1 // pred_check
      _
    $region19: #{tpu_custom_call.1} parent=1 // pred_check_branch
      %53 = sbr.rel (0) target = $region21
    $region20: #{tpu_custom_call.1} parent=1 // pred_region
      _
    $region21: #{tpu_custom_call.1} parent=1 // pred_fallthru
      _
    // Predicated region
    $region22: #{tpu_custom_call.1} parent=1 // pred_check
      _
    $region23: #{tpu_custom_call.1} parent=1 // pred_check_branch
      %55 = sbr.rel (0) target = $region25
    $region24: #{tpu_custom_call.1} parent=1 // pred_region
      %s57 = ssub.s32 1024, 1024
      %58 = vsyncadd [#allocation9], %s57
      %s59 = sshll.u32 [#allocation8], 4
      %s60 = int_to_ptr.vmem [resolvable:$true] %s59
      %65 = dma.hbm_to_vmem [thread:$0]  %s5, 1024, %s60, [#allocation9], 64, 64, 4
    $region25: #{tpu_custom_call.1} parent=1 // pred_fallthru
      _
    // Predicated region
    $region26: #{tpu_custom_call.1} parent=1 // pred_check
      _
    $region27: #{tpu_custom_call.1} parent=1 // pred_check_branch
      %67 = sbr.rel (0) target = $region29
    $region28: #{tpu_custom_call.1} parent=1 // pred_region
      _
    $region29: #{tpu_custom_call.1} parent=1 // pred_fallthru
      _
    // Predicated region
    $region30: #{tpu_custom_call.1} parent=1 // pred_check
      _
    $region31: #{tpu_custom_call.1} parent=1 // pred_check_branch
      %69 = sbr.rel (0) target = $region33
    $region32: #{tpu_custom_call.1} parent=1 // pred_region
      %70 = dma.done [#allocation3], 128
    $region33: #{tpu_custom_call.1} parent=1 // pred_fallthru
      _
    // Predicated region
    $region34: #{tpu_custom_call.1} parent=1 // pred_check
      _
    $region35: #{tpu_custom_call.1} parent=1 // pred_check_branch
      %72 = sbr.rel (0) target = $region37
    $region36: #{tpu_custom_call.1} parent=1 // pred_region
      %73 = dma.done [#allocation6], 512
    $region37: #{tpu_custom_call.1} parent=1 // pred_fallthru
      _
    // Predicated region
    $region38: #{tpu_custom_call.1} parent=1 // pred_check
      _
    $region39: #{tpu_custom_call.1} parent=1 // pred_check_branch
      %75 = sbr.rel (0) target = $region41
    $region40: #{tpu_custom_call.1} parent=1 // pred_region
      %76 = dma.done [#allocation6], 1024
    $region41: #{tpu_custom_call.1} parent=1 // pred_fallthru
      _
    // Predicated region
    $region42: #{tpu_custom_call.1} parent=1 // pred_check
      _
    $region43: #{tpu_custom_call.1} parent=1 // pred_check_branch
      %78 = sbr.rel (0) target = $region45
    $region44: #{tpu_custom_call.1} parent=1 // pred_region
      %79 = dma.done [#allocation9], 1024
    $region45: #{tpu_custom_call.1} parent=1 // pred_fallthru
      _
    %v80 = vld [vmem:[#allocation2] sm:$0xff]
    %v81 = vld [vmem:[#allocation5] sm:$0xf]
    %v82 = vld [vmem:[#allocation5 + $0x4] sm:$0xf]
    %v83 = vld [vmem:[#allocation5 + $0x8] sm:$0xf]
    %v84 = vld [vmem:[#allocation5 + $0xc] sm:$0xf]
    %v85 = vld [vmem:[#allocation5 + $0x10] sm:$0xf]
    %v86 = vld [vmem:[#allocation5 + $0x14] sm:$0xf]
    %v87 = vld [vmem:[#allocation5 + $0x18] sm:$0xf]
    %v88 = vld [vmem:[#allocation5 + $0x1c] sm:$0xf]
    %v89 = vunpack.c.l.bf16 %v81
    %v90 = vunpack.c.l.bf16 %v82
    %v91 = vunpack.c.l.bf16 %v83
    %v92 = vunpack.c.l.bf16 %v84
    %v93 = vunpack.c.l.bf16 %v85
    %v94 = vunpack.c.l.bf16 %v86
    %v95 = vunpack.c.l.bf16 %v87
    %v96 = vunpack.c.l.bf16 %v88
    %v97 = vld [vmem:[%s2] sm:$0x1]
    %v99 = vlaneseq
    %v100 = vshrl.u32 %v99, 7
    %v101 = vsub.s32 0, %v100
    %v102 = vrot.slane %v97, %v101
    %vm104 = vcmask 523264
    %v106 = vsel %vm104, %v80, 0
    %108 = vmatprep.subr.mxu0 0.0
    %109 = vmatpush1.msra.mxu0 0.0
    %110 = vmatprep.subr.mxu0 0.0
    %111 = vmatpush1.msra.mxu0 0.0
    %112 = vmatprep.subr.mxu0 0.0
    %113 = vmatpush1.msra.mxu0 0.0
    %114 = vmatprep.subr.mxu0 0.0
    %115 = vmatpush1.msra.mxu0 0.0
    %116 = vmatprep.subr.mxu0 0.0
    %117 = vmatpush1.msra.mxu0 0.0
    %118 = vmatprep.subr.mxu0 0.0
    %119 = vmatpush1.msra.mxu0 0.0
    %120 = vmatprep.subr.mxu0 0.0
    %121 = vmatpush1.msra.mxu0 0.0
    %122 = vmatprep.subr.mxu0 0.0
    %123 = vmatpush1.msra.mxu0 0.0
    %124 = vmatprep.subr.mxu0 0.0
    %125 = vmatpush1.msra.mxu0 %v96
    %126 = vmatprep.subr.mxu0 0.0
    %127 = vmatpush1.msra.mxu0 %v95
    %128 = vmatprep.subr.mxu0 0.0
    %129 = vmatpush1.msra.mxu0 %v94
    %130 = vmatprep.subr.mxu0 0.0
    %131 = vmatpush1.msra.mxu0 %v93
    %132 = vmatprep.subr.mxu0 0.0
    %133 = vmatpush1.msra.mxu0 %v92
    %134 = vmatprep.subr.mxu0 0.0
    %135 = vmatpush1.msra.mxu0 %v91
    %136 = vmatprep.subr.mxu0 0.0
    %137 = vmatpush1.msra.mxu0 %v90
    %138 = vmatprep.subr.mxu0 0.0
    %139 = vmatpush1.msra.mxu0 %v89
    %140 = vmatprep.subr.mxu0 0.0
    %141 = vmatpush2.msra.mxu0 0.0
    %142 = vmatprep.subr.mxu0 0.0
    %143 = vmatpush2.msra.mxu0 0.0
    %144 = vmatprep.subr.mxu0 0.0
    %145 = vmatpush2.msra.mxu0 0.0
    %146 = vmatprep.subr.mxu0 0.0
    %147 = vmatpush2.msra.mxu0 0.0
    %148 = vmatprep.subr.mxu0 0.0
    %149 = vmatpush2.msra.mxu0 0.0
    %150 = vmatprep.subr.mxu0 0.0
    %151 = vmatpush2.msra.mxu0 0.0
    %152 = vmatprep.subr.mxu0 0.0
    %153 = vmatpush2.msra.mxu0 0.0
    %154 = vmatprep.subr.mxu0 0.0
    %155 = vmatpush2.msra.mxu0 0.0
    %156 = vmatprep.subr.mxu0 0.0
    %157 = vmatpush2.msra.mxu0 0.0
    %158 = vmatprep.subr.mxu0 0.0
    %159 = vmatpush2.msra.mxu0 0.0
    %160 = vmatprep.subr.mxu0 0.0
    %161 = vmatpush2.msra.mxu0 0.0
    %162 = vmatprep.subr.mxu0 0.0
    %163 = vmatpush2.msra.mxu0 0.0
    %164 = vmatprep.subr.mxu0 0.0
    %165 = vmatpush2.msra.mxu0 0.0
    %166 = vmatprep.subr.mxu0 0.0
    %167 = vmatpush2.msra.mxu0 0.0
    %168 = vmatprep.subr.mxu0 0.0
    %169 = vmatpush2.msra.mxu0 0.0
    %170 = vmatprep.subr.mxu0 0.0
    %171 = vmatpush2.msra.mxu0 0.0
    %172 = vmatprep.mubr.f32.mxu0 0.0
    %173 = vmatmul.mubr.f32.gmra.mxu0 %v106
    %v174 = vpop.f32.mrf.mxu0
    %v175 = vadd.f32 %v102, %v174
    %v176 = vpop.f32.mrf.mxu0
    %177 = vdwg.mxu0
    %v178 = vmax.f32 %v175, 0.0
    %v179 = vld [vmem:[#allocation7] sm:$0xf]
    %v180 = vld [vmem:[#allocation7 + $0x4] sm:$0xf]
    %v181 = vld [vmem:[#allocation7 + $0x8] sm:$0xf]
    %v182 = vld [vmem:[#allocation7 + $0xc] sm:$0xf]
    %v183 = vld [vmem:[#allocation7 + $0x10] sm:$0xf]
    %v184 = vld [vmem:[#allocation7 + $0x14] sm:$0xf]
    %v185 = vld [vmem:[#allocation7 + $0x18] sm:$0xf]
    %v186 = vld [vmem:[#allocation7 + $0x1c] sm:$0xf]
    %v187 = vld [vmem:[#allocation7 + $0x20] sm:$0xf]
    %v188 = vld [vmem:[#allocation7 + $0x24] sm:$0xf]
    %v189 = vld [vmem:[#allocation7 + $0x28] sm:$0xf]
    %v190 = vld [vmem:[#allocation7 + $0x2c] sm:$0xf]
    %v191 = vld [vmem:[#allocation7 + $0x30] sm:$0xf]
    %v192 = vld [vmem:[#allocation7 + $0x34] sm:$0xf]
    %v193 = vld [vmem:[#allocation7 + $0x38] sm:$0xf]
    %v194 = vld [vmem:[#allocation7 + $0x3c] sm:$0xf]
    %v195 = vunpack.c.l.bf16 %v179
    %v196 = vunpack.c.l.bf16 %v180
    %v197 = vunpack.c.l.bf16 %v181
    %v198 = vunpack.c.l.bf16 %v182
    %v199 = vunpack.c.l.bf16 %v183
    %v200 = vunpack.c.l.bf16 %v184
    %v201 = vunpack.c.l.bf16 %v185
    %v202 = vunpack.c.l.bf16 %v186
    %v203 = vunpack.c.l.bf16 %v187
    %v204 = vunpack.c.l.bf16 %v188
    %v205 = vunpack.c.l.bf16 %v189
    %v206 = vunpack.c.l.bf16 %v190
    %v207 = vunpack.c.l.bf16 %v191
    %v208 = vunpack.c.l.bf16 %v192
    %v209 = vunpack.c.l.bf16 %v193
    %v210 = vunpack.c.l.bf16 %v194
    %v211 = vld [vmem:[%s4] sm:$0x1]
    %v213 = vlaneseq
    %v214 = vshrl.u32 %v213, 7
    %v215 = vsub.s32 0, %v214
    %v216 = vrot.slane %v211, %v215
    %218 = vmatprep.subr.mxu0 0.0
    %219 = vmatpush1.msra.mxu0 %v210
    %220 = vmatprep.subr.mxu0 0.0
    %221 = vmatpush1.msra.mxu0 %v209
    %222 = vmatprep.subr.mxu0 0.0
    %223 = vmatpush1.msra.mxu0 %v208
    %224 = vmatprep.subr.mxu0 0.0
    %225 = vmatpush1.msra.mxu0 %v207
    %226 = vmatprep.subr.mxu0 0.0
    %227 = vmatpush1.msra.mxu0 %v206
    %228 = vmatprep.subr.mxu0 0.0
    %229 = vmatpush1.msra.mxu0 %v205
    %230 = vmatprep.subr.mxu0 0.0
    %231 = vmatpush1.msra.mxu0 %v204
    %232 = vmatprep.subr.mxu0 0.0
    %233 = vmatpush1.msra.mxu0 %v203
    %234 = vmatprep.subr.mxu0 0.0
    %235 = vmatpush1.msra.mxu0 %v202
    %236 = vmatprep.subr.mxu0 0.0
    %237 = vmatpush1.msra.mxu0 %v201
    %238 = vmatprep.subr.mxu0 0.0
    %239 = vmatpush1.msra.mxu0 %v200
    %240 = vmatprep.subr.mxu0 0.0
    %241 = vmatpush1.msra.mxu0 %v199
    %242 = vmatprep.subr.mxu0 0.0
    %243 = vmatpush1.msra.mxu0 %v198
    %244 = vmatprep.subr.mxu0 0.0
    %245 = vmatpush1.msra.mxu0 %v197
    %246 = vmatprep.subr.mxu0 0.0
    %247 = vmatpush1.msra.mxu0 %v196
    %248 = vmatprep.subr.mxu0 0.0
    %249 = vmatpush1.msra.mxu0 %v195
    %250 = vmatprep.subr.mxu0 0.0
    %251 = vmatpush2.msra.mxu0 0.0
    %252 = vmatprep.subr.mxu0 0.0
    %253 = vmatpush2.msra.mxu0 0.0
    %254 = vmatprep.subr.mxu0 0.0
    %255 = vmatpush2.msra.mxu0 0.0
    %256 = vmatprep.subr.mxu0 0.0
    %257 = vmatpush2.msra.mxu0 0.0
    %258 = vmatprep.subr.mxu0 0.0
    %259 = vmatpush2.msra.mxu0 0.0
    %260 = vmatprep.subr.mxu0 0.0
    %261 = vmatpush2.msra.mxu0 0.0
    %262 = vmatprep.subr.mxu0 0.0
    %263 = vmatpush2.msra.mxu0 0.0
    %264 = vmatprep.subr.mxu0 0.0
    %265 = vmatpush2.msra.mxu0 0.0
    %266 = vmatprep.subr.mxu0 0.0
    %267 = vmatpush2.msra.mxu0 0.0
    %268 = vmatprep.subr.mxu0 0.0
    %269 = vmatpush2.msra.mxu0 0.0
    %270 = vmatprep.subr.mxu0 0.0
    %271 = vmatpush2.msra.mxu0 0.0
    %272 = vmatprep.subr.mxu0 0.0
    %273 = vmatpush2.msra.mxu0 0.0
    %274 = vmatprep.subr.mxu0 0.0
    %275 = vmatpush2.msra.mxu0 0.0
    %276 = vmatprep.subr.mxu0 0.0
    %277 = vmatpush2.msra.mxu0 0.0
    %278 = vmatprep.subr.mxu0 0.0
    %279 = vmatpush2.msra.mxu0 0.0
    %280 = vmatprep.subr.mxu0 0.0
    %281 = vmatpush2.msra.mxu0 0.0
    %282 = vmatprep.mubr.f32.mxu0 0.0
    %283 = vmatmul.mubr.f32.gmra.mxu0 %v178
    %v284 = vpop.f32.mrf.mxu0
    %v285 = vadd.f32 %v216, %v284
    %v286 = vpop.f32.mrf.mxu0
    %287 = vdwg.mxu0
    %v288 = vmax.f32 %v285, 0.0
    %v289 = vld [vmem:[#allocation8] sm:$0xf]
    %v290 = vld [vmem:[#allocation8 + $0x4] sm:$0xf]
    %v291 = vld [vmem:[#allocation8 + $0x8] sm:$0xf]
    %v292 = vld [vmem:[#allocation8 + $0xc] sm:$0xf]
    %v293 = vld [vmem:[#allocation8 + $0x10] sm:$0xf]
    %v294 = vld [vmem:[#allocation8 + $0x14] sm:$0xf]
    %v295 = vld [vmem:[#allocation8 + $0x18] sm:$0xf]
    %v296 = vld [vmem:[#allocation8 + $0x1c] sm:$0xf]
    %v297 = vld [vmem:[#allocation8 + $0x20] sm:$0xf]
    %v298 = vld [vmem:[#allocation8 + $0x24] sm:$0xf]
    %v299 = vld [vmem:[#allocation8 + $0x28] sm:$0xf]
    %v300 = vld [vmem:[#allocation8 + $0x2c] sm:$0xf]
    %v301 = vld [vmem:[#allocation8 + $0x30] sm:$0xf]
    %v302 = vld [vmem:[#allocation8 + $0x34] sm:$0xf]
    %v303 = vld [vmem:[#allocation8 + $0x38] sm:$0xf]
    %v304 = vld [vmem:[#allocation8 + $0x3c] sm:$0xf]
    %v305 = vunpack.c.l.bf16 %v289
    %v306 = vunpack.c.l.bf16 %v290
    %v307 = vunpack.c.l.bf16 %v291
    %v308 = vunpack.c.l.bf16 %v292
    %v309 = vunpack.c.l.bf16 %v293
    %v310 = vunpack.c.l.bf16 %v294
    %v311 = vunpack.c.l.bf16 %v295
    %v312 = vunpack.c.l.bf16 %v296
    %v313 = vunpack.c.l.bf16 %v297
    %v314 = vunpack.c.l.bf16 %v298
    %v315 = vunpack.c.l.bf16 %v299
    %v316 = vunpack.c.l.bf16 %v300
    %v317 = vunpack.c.l.bf16 %v301
    %v318 = vunpack.c.l.bf16 %v302
    %v319 = vunpack.c.l.bf16 %v303
    %v320 = vunpack.c.l.bf16 %v304
    %v321 = vld [vmem:[%s6] sm:$0x1]
    %v323 = vlaneseq
    %v324 = vshrl.u32 %v323, 7
    %v325 = vsub.s32 0, %v324
    %v326 = vrot.slane %v321, %v325
    %328 = vmatprep.subr.mxu0 0.0
    %329 = vmatpush1.msra.mxu0 %v320
    %330 = vmatprep.subr.mxu0 0.0
    %331 = vmatpush1.msra.mxu0 %v319
    %332 = vmatprep.subr.mxu0 0.0
    %333 = vmatpush1.msra.mxu0 %v318
    %334 = vmatprep.subr.mxu0 0.0
    %335 = vmatpush1.msra.mxu0 %v317
    %336 = vmatprep.subr.mxu0 0.0
    %337 = vmatpush1.msra.mxu0 %v316
    %338 = vmatprep.subr.mxu0 0.0
    %339 = vmatpush1.msra.mxu0 %v315
    %340 = vmatprep.subr.mxu0 0.0
    %341 = vmatpush1.msra.mxu0 %v314
    %342 = vmatprep.subr.mxu0 0.0
    %343 = vmatpush1.msra.mxu0 %v313
    %344 = vmatprep.subr.mxu0 0.0
    %345 = vmatpush1.msra.mxu0 %v312
    %346 = vmatprep.subr.mxu0 0.0
    %347 = vmatpush1.msra.mxu0 %v311
    %348 = vmatprep.subr.mxu0 0.0
    %349 = vmatpush1.msra.mxu0 %v310
    %350 = vmatprep.subr.mxu0 0.0
    %351 = vmatpush1.msra.mxu0 %v309
    %352 = vmatprep.subr.mxu0 0.0
    %353 = vmatpush1.msra.mxu0 %v308
    %354 = vmatprep.subr.mxu0 0.0
    %355 = vmatpush1.msra.mxu0 %v307
    %356 = vmatprep.subr.mxu0 0.0
    %357 = vmatpush1.msra.mxu0 %v306
    %358 = vmatprep.subr.mxu0 0.0
    %359 = vmatpush1.msra.mxu0 %v305
    %360 = vmatprep.subr.mxu0 0.0
    %361 = vmatpush2.msra.mxu0 0.0
    %362 = vmatprep.subr.mxu0 0.0
    %363 = vmatpush2.msra.mxu0 0.0
    %364 = vmatprep.subr.mxu0 0.0
    %365 = vmatpush2.msra.mxu0 0.0
    %366 = vmatprep.subr.mxu0 0.0
    %367 = vmatpush2.msra.mxu0 0.0
    %368 = vmatprep.subr.mxu0 0.0
    %369 = vmatpush2.msra.mxu0 0.0
    %370 = vmatprep.subr.mxu0 0.0
    %371 = vmatpush2.msra.mxu0 0.0
    %372 = vmatprep.subr.mxu0 0.0
    %373 = vmatpush2.msra.mxu0 0.0
    %374 = vmatprep.subr.mxu0 0.0
    %375 = vmatpush2.msra.mxu0 0.0
    %376 = vmatprep.subr.mxu0 0.0
    %377 = vmatpush2.msra.mxu0 0.0
    %378 = vmatprep.subr.mxu0 0.0
    %379 = vmatpush2.msra.mxu0 0.0
    %380 = vmatprep.subr.mxu0 0.0
    %381 = vmatpush2.msra.mxu0 0.0
    %382 = vmatprep.subr.mxu0 0.0
    %383 = vmatpush2.msra.mxu0 0.0
    %384 = vmatprep.subr.mxu0 0.0
    %385 = vmatpush2.msra.mxu0 0.0
    %386 = vmatprep.subr.mxu0 0.0
    %387 = vmatpush2.msra.mxu0 0.0
    %388 = vmatprep.subr.mxu0 0.0
    %389 = vmatpush2.msra.mxu0 0.0
    %390 = vmatprep.subr.mxu0 0.0
    %391 = vmatpush2.msra.mxu0 0.0
    %392 = vmatprep.mubr.f32.mxu0 0.0
    %393 = vmatmul.mubr.f32.gmra.mxu0 %v288
    %v394 = vpop.f32.mrf.mxu0
    %v395 = vadd.f32 %v326, %v394
    %v396 = vpop.f32.mrf.mxu0
    %397 = vdwg.mxu0
    %v398 = vmax.f32 %v395, 0.0
    %399 = vst [vmem:[#allocation10] sm:$0xff] %v398
    // Predicated region
    $region46: #{tpu_custom_call.1} parent=1 // pred_check
      _
    $region47: #{tpu_custom_call.1} parent=1 // pred_check_branch
      %401 = sbr.rel (0) target = $region49
    $region48: #{tpu_custom_call.1} parent=1 // pred_region
      %s403 = ssub.s32 128, 128
      %404 = vsyncadd [#allocation4], %s403
      %s406 = sshll.u32 [#allocation10], 4
      %s407 = int_to_ptr.vmem [resolvable:$true] %s406
      %409 = dma.vmem_to_hbm [thread:$0]  %s407, 128, %s7, [#allocation4]
    $region49: #{tpu_custom_call.1} parent=1 // pred_fallthru
      _
    // Predicated region
    $region50: #{tpu_custom_call.1} parent=1 // pred_check
      _
    $region51: #{tpu_custom_call.1} parent=1 // pred_check_branch
      %411 = sbr.rel (0) target = $region53
    $region52: #{tpu_custom_call.1} parent=1 // pred_region
      %412 = dma.done [#allocation4], 128
    $region53: #{tpu_custom_call.1} parent=1 // pred_fallthru
      _
    %413 = vsyncpa [#allocation3], 1
    %414 = vsyncpa [#allocation6], 1
    %415 = vsyncpa [#allocation9], 1
    %416 = vsyncpa [#allocation4], 1

</llo_original>
